<compile_context>
chip_gen: v5e
topology: v5e:2x2
jax: 0.10.0
libtpu: 0.0.40
codegen_flags: <defaults>
</compile_context>

<pallas_src>
import functools

import jax
import jax.numpy as jnp
from jax.experimental import pallas as pl
from jax.experimental.pallas import tpu as pltpu

BINS = 10
LOSS_WEIGHT = 1.0
EDGES = [float(i) / BINS for i in range(BINS + 1)]
EDGES[-1] += 1e-6

LANES = 128
SUBLANES = 8
NCORES = 2                      # v7x dual-TC split; negligible cost on 1-TC chips
DEFAULT_MAX_TILE_ROWS = 4096    # ~2 MiB / input block at 128 lanes
BLOCK_BYTES_BUDGET = 2 * 1024 * 1024
VREG_ROW_BUDGET = 64            # rows * lane_tiles kept live per inner chunk


def _ghmc_kernel(pred_ref, target_ref, lw_ref, cnt_ref, bce_ref, *,
                 batch, tile_rows, chunk_rows, sub, bins):
    c = pl.program_id(0)
    t = pl.program_id(1)
    tiles_per_core = pl.num_programs(1)

    @pl.when(t == 0)
    def _init():
        cnt_ref[...] = jnp.zeros_like(cnt_ref)
        bce_ref[...] = jnp.zeros_like(bce_ref)

    # First global row covered by this grid step. Steps that overshoot the
    # array (clamped block index in the index_map) are fully masked below.
    row0 = (c * tiles_per_core + t) * tile_rows
    groups = chunk_rows // sub
    n_chunks = tile_rows // chunk_rows
    ncols = pred_ref.shape[1]

    def accum(x):
        # (chunk_rows, C) -> (groups, sub, C) -> sum over groups -> (sub, C).
        # Pure vreg adds (no cross-lane/sublane shuffles); the (sub, C)
        # partial is RMW'd into the resident output block with full-tile
        # stores. Final collapse happens once, in the wrapper.
        return jnp.sum(x.reshape(groups, sub, ncols), axis=0)

    @pl.loop(0, n_chunks)
    def _chunk(ci):
        r = pl.multiple_of(ci * chunk_rows, chunk_rows)
        pred = pred_ref[pl.ds(r, chunk_rows), :].astype(jnp.float32)
        target = target_ref[pl.ds(r, chunk_rows), :].astype(jnp.float32)
        lw = lw_ref[pl.ds(r, chunk_rows), :].astype(jnp.float32)

        # Ragged-tail / overshoot row mask (replaces the old jnp.pad copy).
        local = jax.lax.broadcasted_iota(jnp.int32, (chunk_rows, ncols), 0)
        in_rows = (row0 + r + local) < batch
        valid = (lw > 0.0) & in_rows

        # Numerically stable sigmoid + BCE-with-logits:
        #   bce = max(x,0) - x*t + log(1 + exp(-|x|))
        exp_na = jnp.exp(-jnp.abs(pred))
        d = 1.0 / (1.0 + exp_na)
        sig = jnp.where(pred >= 0.0, d, exp_na * d)
        g = jnp.abs(sig - target)
        bce = jnp.maximum(pred, 0.0) - pred * target + jnp.log(1.0 + exp_na)
        bce = jnp.where(valid, bce, 0.0)   # also kills NaN/Inf from padded rows

        # One bin-index compute replaces the per-bin (>=, <, &) compare pairs;
        # matches edges = [0, .1, ..., 1 + 1e-6] for g in [0, 1] (binary targets).
        bin_id = jnp.minimum(jnp.floor(g * bins).astype(jnp.int32), bins - 1)
        bin_id = jnp.where(valid, bin_id, -1)

        # Slot (bins-1) holds the *totals* over all valid elements; bins
        # 0..bins-2 are accumulated directly and the last bin is recovered by
        # subtraction in the wrapper (every valid element is in exactly one
        # bin), saving one full bin of compare/select/reduce work per chunk.
        # NOTE: f32 counters stay exact up to 2^24 per accumulator cell.
        cnt_ref[bins - 1] += accum(valid.astype(jnp.float32))
        bce_ref[bins - 1] += accum(bce)
        for i in range(bins - 1):
            m = bin_id == i
            cnt_ref[i] += accum(m.astype(jnp.float32))
            bce_ref[i] += accum(jnp.where(m, bce, 0.0))


@functools.partial(jax.jit,
                   static_argnames=("max_tile_rows", "bins", "loss_weight"))
def ghmc_loss(pred, target, label_weight, *, max_tile_rows=DEFAULT_MAX_TILE_ROWS,
              bins=BINS, loss_weight=LOSS_WEIGHT):
    assert pred.ndim == 2 and pred.shape == target.shape == label_weight.shape
    B, C = pred.shape
    lane_tiles = pl.cdiv(C, LANES)

    # Sublane-group size for the partial accumulators (8 normally, B if tiny).
    sub = SUBLANES if B >= SUBLANES else B
    rows_aligned = (B // sub) * sub if B >= sub else B

    # Chunk: rows whose intermediates (sig/bce/bin_id) stay in vregs.
    chunk_rows = max(sub, (VREG_ROW_BUDGET // lane_tiles) // sub * sub)
    chunk_rows = min(chunk_rows, rows_aligned,
                     max(sub, (max_tile_rows // sub) * sub))

    # Tile: as big as the VMEM budget allows (amortizes grid-step overhead),
    # a whole number of chunks, never exceeding the (8-aligned) array rows.
    budget_rows = max(chunk_rows, BLOCK_BYTES_BUDGET // (lane_tiles * LANES * 4))
    tile_rows = min(budget_rows, max_tile_rows, rows_aligned)
    tile_rows = max(chunk_rows, (tile_rows // chunk_rows) * chunk_rows)

    total_tiles = pl.cdiv(B, tile_rows)
    ncores = NCORES if total_tiles >= NCORES else 1
    tiles_per_core = pl.cdiv(total_tiles, ncores)

    kernel = functools.partial(_ghmc_kernel, batch=B, tile_rows=tile_rows,
                               chunk_rows=chunk_rows, sub=sub, bins=bins)

    in_blk = pl.BlockSpec(
        (tile_rows, C),
        lambda c, t: (jnp.minimum(c * tiles_per_core + t, total_tiles - 1), 0))
    out_blk = pl.BlockSpec((None, bins, sub, C), lambda c, t: (c, 0, 0, 0))
    out_sd = jax.ShapeDtypeStruct((ncores, bins, sub, C), jnp.float32)

    cnt_parts, bce_parts = pl.pallas_call(
        kernel,
        out_shape=(out_sd, out_sd),
        grid_spec=pltpu.PrefetchScalarGridSpec(
            num_scalar_prefetch=0,
            grid=(ncores, tiles_per_core),
            in_specs=[in_blk, in_blk, in_blk],
            out_specs=(out_blk, out_blk)),
        compiler_params=pltpu.CompilerParams(
            dimension_semantics=("parallel", "arbitrary"),
            vmem_limit_bytes=32 * 1024 * 1024),
    )(pred, target, label_weight)

    # Tiny finalize in plain XLA: collapse (core, sublane, lane), recover the
    # last bin from the totals slot, then loss = (1/n) * sum_i bce_i / cnt_i.
    cnt = jnp.sum(cnt_parts, axis=(0, 2, 3))
    bce = jnp.sum(bce_parts, axis=(0, 2, 3))
    cnt = cnt.at[bins - 1].set(cnt[bins - 1] - jnp.sum(cnt[:bins - 1]))
    bce = bce.at[bins - 1].set(bce[bins - 1] - jnp.sum(bce[:bins - 1]))
    has = cnt > 0.5                        # counts are exact integers in f32
    n = jnp.sum(has.astype(jnp.float32))
    per_bin = jnp.where(has, bce / jnp.maximum(cnt, 1.0), 0.0)
    loss = jnp.where(n > 0.0, jnp.sum(per_bin) / jnp.maximum(n, 1.0), 0.0)
    return loss * loss_weight


def ghmc_loss_ref(pred, target, label_weight):
    """Pure-JAX reference, mirroring the PyTorch forward (momentum=0)."""
    pred = pred.astype(jnp.float32)
    target = target.astype(jnp.float32)
    lw = label_weight.astype(jnp.float32)
    g = jnp.abs(jax.nn.sigmoid(pred) - target)
    valid = lw > 0
    tot = jnp.maximum(jnp.sum(valid.astype(jnp.float32)), 1.0)
    weights = jnp.zeros_like(pred)
    n = 0.0
    for i in range(BINS):
        inds = (g >= EDGES[i]) & (g < EDGES[i + 1]) & valid
        num = jnp.sum(inds.astype(jnp.float32))
        has = num > 0
        weights = weights + inds.astype(jnp.float32) * jnp.where(
            has, tot / jnp.maximum(num, 1.0), 0.0)
        n = n + has.astype(jnp.float32)
    weights = jnp.where(n > 0, weights / jnp.maximum(n, 1.0), weights)
    bce = (jnp.maximum(pred, 0.0) - pred * target
           + jnp.log1p(jnp.exp(-jnp.abs(pred))))
    return jnp.sum(bce * weights) / tot * LOSS_WEIGHT


if __name__ == "__main__":
    key = jax.random.PRNGKey(0)

    # Shapes follow the module's [batch_num, class_num] contract.
    #  - (16, 32): single tile, single core.
    #  - (64, 100) with a small tile cap: multi-tile grid + dual-core split.
    #  - (37, 100) with bf16 target/label_weight: ragged row tail, grid
    #    overshoot masking, and narrow-dtype streaming.
    cases = [
        ((16, 32), DEFAULT_MAX_TILE_ROWS, jnp.float32),
        ((64, 100), 16, jnp.float32),
        ((37, 100), 16, jnp.bfloat16),
    ]
    for (B, C), tile_cap, wdt in cases:
        k1, k2, k3, key = jax.random.split(key, 4)
        pred = jax.random.normal(k1, (B, C), dtype=jnp.float32) * 2.0
        target = (jax.random.uniform(k2, (B, C)) > 0.8).astype(wdt)
        label_weight = (jax.random.uniform(k3, (B, C)) > 0.1).astype(wdt)

        loss = ghmc_loss(pred, target, label_weight, max_tile_rows=tile_cap)
        jax.block_until_ready(loss)

        loss_ref = ghmc_loss_ref(pred, target, label_weight)
        assert jnp.allclose(loss, loss_ref, rtol=1e-4, atol=1e-5), (
            (B, C), loss, loss_ref)

    print("KERNEL_OK")
</pallas_src>

<mosaic_0001>
module attributes {stable_mosaic.version = 11 : i64} {
  func.func @_ghmc_kernel(%arg0: i32, %arg1: i32, %arg2: memref<16x32xf32, #tpu.memory_space<vmem>>, %arg3: memref<16x32xf32, #tpu.memory_space<vmem>>, %arg4: memref<16x32xf32, #tpu.memory_space<vmem>>, %arg5: memref<1x10x8x32xf32, #tpu.memory_space<vmem>>, %arg6: memref<1x10x8x32xf32, #tpu.memory_space<vmem>>) attributes {dimension_semantics = [#tpu.dimension_semantics<parallel>, #tpu.dimension_semantics<arbitrary>], iteration_bounds = array<i64: 1, 1>, scalar_prefetch = 0 : i64, scratch_operands = 0 : i64, tpu.core_type = #tpu.core_type<tc>, window_params = [{transform_indices = @transform_0, window_bounds = array<i64: 16, 32>}, {transform_indices = @transform_1, window_bounds = array<i64: 16, 32>}, {transform_indices = @transform_2, window_bounds = array<i64: 16, 32>}, {transform_indices = @transform_3, window_bounds = array<i64: 1, 10, 8, 32>}, {transform_indices = @transform_4, window_bounds = array<i64: 1, 10, 8, 32>}]} {
    %c0_i32 = arith.constant 0 : i32
    %0 = arith.cmpi eq, %arg1, %c0_i32 : i32
    %1 = arith.extui %0 : i1 to i32
    %c0_i32_0 = arith.constant 0 : i32
    %2 = arith.cmpi ne, %1, %c0_i32_0 : i32
    scf.if %2 {
      %cst_199 = arith.constant 0.000000e+00 : f32
      %273 = vector.broadcast %cst_199 : f32 to vector<10x8x32xf32>
      %c0_200 = arith.constant 0 : index
      %c0_201 = arith.constant 0 : index
      %c0_202 = arith.constant 0 : index
      %c0_203 = arith.constant 0 : index
      %274 = vector.load %arg5[%c0_200, %c0_201, %c0_202, %c0_203] : memref<1x10x8x32xf32, #tpu.memory_space<vmem>>, vector<1x10x8x32xf32>
      %275 = vector.shape_cast %274 : vector<1x10x8x32xf32> to vector<10x8x32xf32>
      %276 = vector.shape_cast %273 : vector<10x8x32xf32> to vector<1x10x8x32xf32>
      tpu.vector_store %arg5[%c0_200, %c0_201, %c0_202, %c0_203], %276 {strides = array<i32>} : memref<1x10x8x32xf32, #tpu.memory_space<vmem>>, vector<1x10x8x32xf32>,
      %cst_204 = arith.constant 0.000000e+00 : f32
      %277 = vector.broadcast %cst_204 : f32 to vector<10x8x32xf32>
      %c0_205 = arith.constant 0 : index
      %c0_206 = arith.constant 0 : index
      %c0_207 = arith.constant 0 : index
      %c0_208 = arith.constant 0 : index
      %278 = vector.load %arg6[%c0_205, %c0_206, %c0_207, %c0_208] : memref<1x10x8x32xf32, #tpu.memory_space<vmem>>, vector<1x10x8x32xf32>
      %279 = vector.shape_cast %278 : vector<1x10x8x32xf32> to vector<10x8x32xf32>
      %280 = vector.shape_cast %277 : vector<10x8x32xf32> to vector<1x10x8x32xf32>
      tpu.vector_store %arg6[%c0_205, %c0_206, %c0_207, %c0_208], %280 {strides = array<i32>} : memref<1x10x8x32xf32, #tpu.memory_space<vmem>>, vector<1x10x8x32xf32>,
    } else {
    }
    %c1_i32 = arith.constant 1 : i32
    %3 = arith.muli %arg0, %c1_i32 : i32
    %4 = arith.addi %3, %arg1 : i32
    %c16_i32 = arith.constant 16 : i32
    %5 = arith.muli %4, %c16_i32 : i32
    %c0_i32_1 = arith.constant 0 : i32
    %c1_i32_2 = arith.constant 1 : i32
    %6 = arith.muli %c0_i32_1, %c1_i32_2 : i32
    %c0_i32_3 = arith.constant 0 : i32
    %7 = arith.addi %c0_i32_3, %6 : i32
    %c16_i32_4 = arith.constant 16 : i32
    %8 = arith.muli %7, %c16_i32_4 : i32
    %9 = tpu.assume_multiple %8, 16 : i32
    %10 = arith.index_cast %9 : i32 to index
    %c0 = arith.constant 0 : index
    %11 = vector.load %arg2[%10, %c0] : memref<16x32xf32, #tpu.memory_space<vmem>>, vector<16x32xf32>
    %12 = arith.index_cast %9 : i32 to index
    %c0_5 = arith.constant 0 : index
    %13 = vector.load %arg3[%12, %c0_5] : memref<16x32xf32, #tpu.memory_space<vmem>>, vector<16x32xf32>
    %14 = arith.index_cast %9 : i32 to index
    %c0_6 = arith.constant 0 : index
    %15 = vector.load %arg4[%14, %c0_6] : memref<16x32xf32, #tpu.memory_space<vmem>>, vector<16x32xf32>
    %16 = tpu.iota {dimensions = array<i32: 0>} : vector<16x32xi32>
    %17 = arith.addi %5, %9 : i32
    %18 = vector.broadcast %17 : i32 to vector<16x32xi32>
    %19 = arith.addi %18, %16 : vector<16x32xi32>
    %c16_i32_7 = arith.constant 16 : i32
    %20 = vector.broadcast %c16_i32_7 : i32 to vector<16x32xi32>
    %21 = arith.cmpi slt, %19, %20 : vector<16x32xi32>
    %cst = arith.constant 0.000000e+00 : f32
    %22 = vector.broadcast %cst : f32 to vector<16x32xf32>
    %23 = arith.cmpf ogt, %15, %22 : vector<16x32xf32>
    %24 = arith.andi %23, %21 : vector<16x32xi1>
    %25 = math.absf %11 : vector<16x32xf32>
    %cst_8 = arith.constant 0.000000e+00 : f32
    %26 = vector.broadcast %cst_8 : f32 to vector<16x32xf32>
    %27 = arith.subf %26, %25 : vector<16x32xf32>
    %28 = math.exp %27 : vector<16x32xf32>
    %cst_9 = arith.constant 1.000000e+00 : f32
    %29 = vector.broadcast %cst_9 : f32 to vector<16x32xf32>
    %30 = arith.addf %29, %28 : vector<16x32xf32>
    %cst_10 = arith.constant 1.000000e+00 : f32
    %31 = vector.broadcast %cst_10 : f32 to vector<16x32xf32>
    %32 = arith.divf %31, %30 : vector<16x32xf32>
    %cst_11 = arith.constant 0.000000e+00 : f32
    %33 = vector.broadcast %cst_11 : f32 to vector<16x32xf32>
    %34 = arith.cmpf oge, %11, %33 : vector<16x32xf32>
    %35 = arith.mulf %28, %32 : vector<16x32xf32>
    %36 = arith.select %34, %32, %35 : vector<16x32xi1>, vector<16x32xf32>
    %37 = arith.subf %36, %13 : vector<16x32xf32>
    %38 = math.absf %37 : vector<16x32xf32>
    %cst_12 = arith.constant 0.000000e+00 : f32
    %39 = vector.broadcast %cst_12 : f32 to vector<16x32xf32>
    %40 = arith.maximumf %11, %39 : vector<16x32xf32>
    %41 = arith.mulf %11, %13 : vector<16x32xf32>
    %42 = arith.subf %40, %41 : vector<16x32xf32>
    %cst_13 = arith.constant 1.000000e+00 : f32
    %43 = vector.broadcast %cst_13 : f32 to vector<16x32xf32>
    %44 = arith.addf %43, %28 : vector<16x32xf32>
    %45 = math.log %44 : vector<16x32xf32>
    %46 = arith.addf %42, %45 : vector<16x32xf32>
    %cst_14 = arith.constant 0.000000e+00 : f32
    %47 = vector.broadcast %cst_14 : f32 to vector<16x32xf32>
    %48 = arith.select %24, %46, %47 : vector<16x32xi1>, vector<16x32xf32>
    %cst_15 = arith.constant 1.000000e+01 : f32
    %49 = vector.broadcast %cst_15 : f32 to vector<16x32xf32>
    %50 = arith.mulf %38, %49 : vector<16x32xf32>
    %51 = math.floor %50 : vector<16x32xf32>
    %52 = arith.fptosi %51 : vector<16x32xf32> to vector<16x32xi32>
    %c9_i32 = arith.constant 9 : i32
    %53 = vector.broadcast %c9_i32 : i32 to vector<16x32xi32>
    %54 = arith.minsi %52, %53 : vector<16x32xi32>
    %c-1_i32 = arith.constant -1 : i32
    %55 = vector.broadcast %c-1_i32 : i32 to vector<16x32xi32>
    %56 = arith.select %24, %54, %55 : vector<16x32xi1>, vector<16x32xi32>
    %c0_16 = arith.constant 0 : index
    %c9 = arith.constant 9 : index
    %c0_17 = arith.constant 0 : index
    %c0_18 = arith.constant 0 : index
    %57 = vector.load %arg5[%c0_16, %c9, %c0_17, %c0_18] : memref<1x10x8x32xf32, #tpu.memory_space<vmem>>, vector<1x1x8x32xf32>
    %58 = vector.shape_cast %57 : vector<1x1x8x32xf32> to vector<8x32xf32>
    %59 = arith.extui %24 : vector<16x32xi1> to vector<16x32xi32>
    %60 = arith.sitofp %59 : vector<16x32xi32> to vector<16x32xf32>
    %61 = vector.shape_cast %60 : vector<16x32xf32> to vector<2x8x32xf32>
    %cst_19 = arith.constant dense<0.000000e+00> : vector<8x32xf32>
    %62 = vector.multi_reduction <add>, %61, %cst_19 [0] : vector<2x8x32xf32> to vector<8x32xf32>
    %63 = arith.addf %58, %62 : vector<8x32xf32>
    %c0_20 = arith.constant 0 : index
    %c9_21 = arith.constant 9 : index
    %c0_22 = arith.constant 0 : index
    %c0_23 = arith.constant 0 : index
    %64 = vector.load %arg5[%c0_20, %c9_21, %c0_22, %c0_23] : memref<1x10x8x32xf32, #tpu.memory_space<vmem>>, vector<1x1x8x32xf32>
    %65 = vector.shape_cast %64 : vector<1x1x8x32xf32> to vector<8x32xf32>
    %66 = vector.shape_cast %63 : vector<8x32xf32> to vector<1x1x8x32xf32>
    tpu.vector_store %arg5[%c0_20, %c9_21, %c0_22, %c0_23], %66 {strides = array<i32>} : memref<1x10x8x32xf32, #tpu.memory_space<vmem>>, vector<1x1x8x32xf32>,
    %c0_24 = arith.constant 0 : index
    %c9_25 = arith.constant 9 : index
    %c0_26 = arith.constant 0 : index
    %c0_27 = arith.constant 0 : index
    %67 = vector.load %arg6[%c0_24, %c9_25, %c0_26, %c0_27] : memref<1x10x8x32xf32, #tpu.memory_space<vmem>>, vector<1x1x8x32xf32>
    %68 = vector.shape_cast %67 : vector<1x1x8x32xf32> to vector<8x32xf32>
    %69 = vector.shape_cast %48 : vector<16x32xf32> to vector<2x8x32xf32>
    %cst_28 = arith.constant dense<0.000000e+00> : vector<8x32xf32>
    %70 = vector.multi_reduction <add>, %69, %cst_28 [0] : vector<2x8x32xf32> to vector<8x32xf32>
    %71 = arith.addf %68, %70 : vector<8x32xf32>
    %c0_29 = arith.constant 0 : index
    %c9_30 = arith.constant 9 : index
    %c0_31 = arith.constant 0 : index
    %c0_32 = arith.constant 0 : index
    %72 = vector.load %arg6[%c0_29, %c9_30, %c0_31, %c0_32] : memref<1x10x8x32xf32, #tpu.memory_space<vmem>>, vector<1x1x8x32xf32>
    %73 = vector.shape_cast %72 : vector<1x1x8x32xf32> to vector<8x32xf32>
    %74 = vector.shape_cast %71 : vector<8x32xf32> to vector<1x1x8x32xf32>
    tpu.vector_store %arg6[%c0_29, %c9_30, %c0_31, %c0_32], %74 {strides = array<i32>} : memref<1x10x8x32xf32, #tpu.memory_space<vmem>>, vector<1x1x8x32xf32>,
    %c0_i32_33 = arith.constant 0 : i32
    %75 = vector.broadcast %c0_i32_33 : i32 to vector<16x32xi32>
    %76 = arith.cmpi eq, %56, %75 : vector<16x32xi32>
    %c0_34 = arith.constant 0 : index
    %c0_35 = arith.constant 0 : index
    %c0_36 = arith.constant 0 : index
    %c0_37 = arith.constant 0 : index
    %77 = vector.load %arg5[%c0_34, %c0_35, %c0_36, %c0_37] : memref<1x10x8x32xf32, #tpu.memory_space<vmem>>, vector<1x1x8x32xf32>
    %78 = vector.shape_cast %77 : vector<1x1x8x32xf32> to vector<8x32xf32>
    %79 = arith.extui %76 : vector<16x32xi1> to vector<16x32xi32>
    %80 = arith.sitofp %79 : vector<16x32xi32> to vector<16x32xf32>
    %81 = vector.shape_cast %80 : vector<16x32xf32> to vector<2x8x32xf32>
    %cst_38 = arith.constant dense<0.000000e+00> : vector<8x32xf32>
    %82 = vector.multi_reduction <add>, %81, %cst_38 [0] : vector<2x8x32xf32> to vector<8x32xf32>
    %83 = arith.addf %78, %82 : vector<8x32xf32>
    %c0_39 = arith.constant 0 : index
    %c0_40 = arith.constant 0 : index
    %c0_41 = arith.constant 0 : index
    %c0_42 = arith.constant 0 : index
    %84 = vector.load %arg5[%c0_39, %c0_40, %c0_41, %c0_42] : memref<1x10x8x32xf32, #tpu.memory_space<vmem>>, vector<1x1x8x32xf32>
    %85 = vector.shape_cast %84 : vector<1x1x8x32xf32> to vector<8x32xf32>
    %86 = vector.shape_cast %83 : vector<8x32xf32> to vector<1x1x8x32xf32>
    tpu.vector_store %arg5[%c0_39, %c0_40, %c0_41, %c0_42], %86 {strides = array<i32>} : memref<1x10x8x32xf32, #tpu.memory_space<vmem>>, vector<1x1x8x32xf32>,
    %c0_43 = arith.constant 0 : index
    %c0_44 = arith.constant 0 : index
    %c0_45 = arith.constant 0 : index
    %c0_46 = arith.constant 0 : index
    %87 = vector.load %arg6[%c0_43, %c0_44, %c0_45, %c0_46] : memref<1x10x8x32xf32, #tpu.memory_space<vmem>>, vector<1x1x8x32xf32>
    %88 = vector.shape_cast %87 : vector<1x1x8x32xf32> to vector<8x32xf32>
    %cst_47 = arith.constant 0.000000e+00 : f32
    %89 = vector.broadcast %cst_47 : f32 to vector<16x32xf32>
    %90 = arith.select %76, %48, %89 : vector<16x32xi1>, vector<16x32xf32>
    %91 = vector.shape_cast %90 : vector<16x32xf32> to vector<2x8x32xf32>
    %cst_48 = arith.constant dense<0.000000e+00> : vector<8x32xf32>
    %92 = vector.multi_reduction <add>, %91, %cst_48 [0] : vector<2x8x32xf32> to vector<8x32xf32>
    %93 = arith.addf %88, %92 : vector<8x32xf32>
    %c0_49 = arith.constant 0 : index
    %c0_50 = arith.constant 0 : index
    %c0_51 = arith.constant 0 : index
    %c0_52 = arith.constant 0 : index
    %94 = vector.load %arg6[%c0_49, %c0_50, %c0_51, %c0_52] : memref<1x10x8x32xf32, #tpu.memory_space<vmem>>, vector<1x1x8x32xf32>
    %95 = vector.shape_cast %94 : vector<1x1x8x32xf32> to vector<8x32xf32>
    %96 = vector.shape_cast %93 : vector<8x32xf32> to vector<1x1x8x32xf32>
    tpu.vector_store %arg6[%c0_49, %c0_50, %c0_51, %c0_52], %96 {strides = array<i32>} : memref<1x10x8x32xf32, #tpu.memory_space<vmem>>, vector<1x1x8x32xf32>,
    %c1_i32_53 = arith.constant 1 : i32
    %97 = vector.broadcast %c1_i32_53 : i32 to vector<16x32xi32>
    %98 = arith.cmpi eq, %56, %97 : vector<16x32xi32>
    %c0_54 = arith.constant 0 : index
    %c1 = arith.constant 1 : index
    %c0_55 = arith.constant 0 : index
    %c0_56 = arith.constant 0 : index
    %99 = vector.load %arg5[%c0_54, %c1, %c0_55, %c0_56] : memref<1x10x8x32xf32, #tpu.memory_space<vmem>>, vector<1x1x8x32xf32>
    %100 = vector.shape_cast %99 : vector<1x1x8x32xf32> to vector<8x32xf32>
    %101 = arith.extui %98 : vector<16x32xi1> to vector<16x32xi32>
    %102 = arith.sitofp %101 : vector<16x32xi32> to vector<16x32xf32>
    %103 = vector.shape_cast %102 : vector<16x32xf32> to vector<2x8x32xf32>
    %cst_57 = arith.constant dense<0.000000e+00> : vector<8x32xf32>
    %104 = vector.multi_reduction <add>, %103, %cst_57 [0] : vector<2x8x32xf32> to vector<8x32xf32>
    %105 = arith.addf %100, %104 : vector<8x32xf32>
    %c0_58 = arith.constant 0 : index
    %c1_59 = arith.constant 1 : index
    %c0_60 = arith.constant 0 : index
    %c0_61 = arith.constant 0 : index
    %106 = vector.load %arg5[%c0_58, %c1_59, %c0_60, %c0_61] : memref<1x10x8x32xf32, #tpu.memory_space<vmem>>, vector<1x1x8x32xf32>
    %107 = vector.shape_cast %106 : vector<1x1x8x32xf32> to vector<8x32xf32>
    %108 = vector.shape_cast %105 : vector<8x32xf32> to vector<1x1x8x32xf32>
    tpu.vector_store %arg5[%c0_58, %c1_59, %c0_60, %c0_61], %108 {strides = array<i32>} : memref<1x10x8x32xf32, #tpu.memory_space<vmem>>, vector<1x1x8x32xf32>,
    %c0_62 = arith.constant 0 : index
    %c1_63 = arith.constant 1 : index
    %c0_64 = arith.constant 0 : index
    %c0_65 = arith.constant 0 : index
    %109 = vector.load %arg6[%c0_62, %c1_63, %c0_64, %c0_65] : memref<1x10x8x32xf32, #tpu.memory_space<vmem>>, vector<1x1x8x32xf32>
    %110 = vector.shape_cast %109 : vector<1x1x8x32xf32> to vector<8x32xf32>
    %cst_66 = arith.constant 0.000000e+00 : f32
    %111 = vector.broadcast %cst_66 : f32 to vector<16x32xf32>
    %112 = arith.select %98, %48, %111 : vector<16x32xi1>, vector<16x32xf32>
    %113 = vector.shape_cast %112 : vector<16x32xf32> to vector<2x8x32xf32>
    %cst_67 = arith.constant dense<0.000000e+00> : vector<8x32xf32>
    %114 = vector.multi_reduction <add>, %113, %cst_67 [0] : vector<2x8x32xf32> to vector<8x32xf32>
    %115 = arith.addf %110, %114 : vector<8x32xf32>
    %c0_68 = arith.constant 0 : index
    %c1_69 = arith.constant 1 : index
    %c0_70 = arith.constant 0 : index
    %c0_71 = arith.constant 0 : index
    %116 = vector.load %arg6[%c0_68, %c1_69, %c0_70, %c0_71] : memref<1x10x8x32xf32, #tpu.memory_space<vmem>>, vector<1x1x8x32xf32>
    %117 = vector.shape_cast %116 : vector<1x1x8x32xf32> to vector<8x32xf32>
    %118 = vector.shape_cast %115 : vector<8x32xf32> to vector<1x1x8x32xf32>
    tpu.vector_store %arg6[%c0_68, %c1_69, %c0_70, %c0_71], %118 {strides = array<i32>} : memref<1x10x8x32xf32, #tpu.memory_space<vmem>>, vector<1x1x8x32xf32>,
    %c2_i32 = arith.constant 2 : i32
    %119 = vector.broadcast %c2_i32 : i32 to vector<16x32xi32>
    %120 = arith.cmpi eq, %56, %119 : vector<16x32xi32>
    %c0_72 = arith.constant 0 : index
    %c2 = arith.constant 2 : index
    %c0_73 = arith.constant 0 : index
    %c0_74 = arith.constant 0 : index
    %121 = vector.load %arg5[%c0_72, %c2, %c0_73, %c0_74] : memref<1x10x8x32xf32, #tpu.memory_space<vmem>>, vector<1x1x8x32xf32>
    %122 = vector.shape_cast %121 : vector<1x1x8x32xf32> to vector<8x32xf32>
    %123 = arith.extui %120 : vector<16x32xi1> to vector<16x32xi32>
    %124 = arith.sitofp %123 : vector<16x32xi32> to vector<16x32xf32>
    %125 = vector.shape_cast %124 : vector<16x32xf32> to vector<2x8x32xf32>
    %cst_75 = arith.constant dense<0.000000e+00> : vector<8x32xf32>
    %126 = vector.multi_reduction <add>, %125, %cst_75 [0] : vector<2x8x32xf32> to vector<8x32xf32>
    %127 = arith.addf %122, %126 : vector<8x32xf32>
    %c0_76 = arith.constant 0 : index
    %c2_77 = arith.constant 2 : index
    %c0_78 = arith.constant 0 : index
    %c0_79 = arith.constant 0 : index
    %128 = vector.load %arg5[%c0_76, %c2_77, %c0_78, %c0_79] : memref<1x10x8x32xf32, #tpu.memory_space<vmem>>, vector<1x1x8x32xf32>
    %129 = vector.shape_cast %128 : vector<1x1x8x32xf32> to vector<8x32xf32>
    %130 = vector.shape_cast %127 : vector<8x32xf32> to vector<1x1x8x32xf32>
    tpu.vector_store %arg5[%c0_76, %c2_77, %c0_78, %c0_79], %130 {strides = array<i32>} : memref<1x10x8x32xf32, #tpu.memory_space<vmem>>, vector<1x1x8x32xf32>,
    %c0_80 = arith.constant 0 : index
    %c2_81 = arith.constant 2 : index
    %c0_82 = arith.constant 0 : index
    %c0_83 = arith.constant 0 : index
    %131 = vector.load %arg6[%c0_80, %c2_81, %c0_82, %c0_83] : memref<1x10x8x32xf32, #tpu.memory_space<vmem>>, vector<1x1x8x32xf32>
    %132 = vector.shape_cast %131 : vector<1x1x8x32xf32> to vector<8x32xf32>
    %cst_84 = arith.constant 0.000000e+00 : f32
    %133 = vector.broadcast %cst_84 : f32 to vector<16x32xf32>
    %134 = arith.select %120, %48, %133 : vector<16x32xi1>, vector<16x32xf32>
    %135 = vector.shape_cast %134 : vector<16x32xf32> to vector<2x8x32xf32>
    %cst_85 = arith.constant dense<0.000000e+00> : vector<8x32xf32>
    %136 = vector.multi_reduction <add>, %135, %cst_85 [0] : vector<2x8x32xf32> to vector<8x32xf32>
    %137 = arith.addf %132, %136 : vector<8x32xf32>
    %c0_86 = arith.constant 0 : index
    %c2_87 = arith.constant 2 : index
    %c0_88 = arith.constant 0 : index
    %c0_89 = arith.constant 0 : index
    %138 = vector.load %arg6[%c0_86, %c2_87, %c0_88, %c0_89] : memref<1x10x8x32xf32, #tpu.memory_space<vmem>>, vector<1x1x8x32xf32>
    %139 = vector.shape_cast %138 : vector<1x1x8x32xf32> to vector<8x32xf32>
    %140 = vector.shape_cast %137 : vector<8x32xf32> to vector<1x1x8x32xf32>
    tpu.vector_store %arg6[%c0_86, %c2_87, %c0_88, %c0_89], %140 {strides = array<i32>} : memref<1x10x8x32xf32, #tpu.memory_space<vmem>>, vector<1x1x8x32xf32>,
    %c3_i32 = arith.constant 3 : i32
    %141 = vector.broadcast %c3_i32 : i32 to vector<16x32xi32>
    %142 = arith.cmpi eq, %56, %141 : vector<16x32xi32>
    %c0_90 = arith.constant 0 : index
    %c3 = arith.constant 3 : index
    %c0_91 = arith.constant 0 : index
    %c0_92 = arith.constant 0 : index
    %143 = vector.load %arg5[%c0_90, %c3, %c0_91, %c0_92] : memref<1x10x8x32xf32, #tpu.memory_space<vmem>>, vector<1x1x8x32xf32>
    %144 = vector.shape_cast %143 : vector<1x1x8x32xf32> to vector<8x32xf32>
    %145 = arith.extui %142 : vector<16x32xi1> to vector<16x32xi32>
    %146 = arith.sitofp %145 : vector<16x32xi32> to vector<16x32xf32>
    %147 = vector.shape_cast %146 : vector<16x32xf32> to vector<2x8x32xf32>
    %cst_93 = arith.constant dense<0.000000e+00> : vector<8x32xf32>
    %148 = vector.multi_reduction <add>, %147, %cst_93 [0] : vector<2x8x32xf32> to vector<8x32xf32>
    %149 = arith.addf %144, %148 : vector<8x32xf32>
    %c0_94 = arith.constant 0 : index
    %c3_95 = arith.constant 3 : index
    %c0_96 = arith.constant 0 : index
    %c0_97 = arith.constant 0 : index
    %150 = vector.load %arg5[%c0_94, %c3_95, %c0_96, %c0_97] : memref<1x10x8x32xf32, #tpu.memory_space<vmem>>, vector<1x1x8x32xf32>
    %151 = vector.shape_cast %150 : vector<1x1x8x32xf32> to vector<8x32xf32>
    %152 = vector.shape_cast %149 : vector<8x32xf32> to vector<1x1x8x32xf32>
    tpu.vector_store %arg5[%c0_94, %c3_95, %c0_96, %c0_97], %152 {strides = array<i32>} : memref<1x10x8x32xf32, #tpu.memory_space<vmem>>, vector<1x1x8x32xf32>,
    %c0_98 = arith.constant 0 : index
    %c3_99 = arith.constant 3 : index
    %c0_100 = arith.constant 0 : index
    %c0_101 = arith.constant 0 : index
    %153 = vector.load %arg6[%c0_98, %c3_99, %c0_100, %c0_101] : memref<1x10x8x32xf32, #tpu.memory_space<vmem>>, vector<1x1x8x32xf32>
    %154 = vector.shape_cast %153 : vector<1x1x8x32xf32> to vector<8x32xf32>
    %cst_102 = arith.constant 0.000000e+00 : f32
    %155 = vector.broadcast %cst_102 : f32 to vector<16x32xf32>
    %156 = arith.select %142, %48, %155 : vector<16x32xi1>, vector<16x32xf32>
    %157 = vector.shape_cast %156 : vector<16x32xf32> to vector<2x8x32xf32>
    %cst_103 = arith.constant dense<0.000000e+00> : vector<8x32xf32>
    %158 = vector.multi_reduction <add>, %157, %cst_103 [0] : vector<2x8x32xf32> to vector<8x32xf32>
    %159 = arith.addf %154, %158 : vector<8x32xf32>
    %c0_104 = arith.constant 0 : index
    %c3_105 = arith.constant 3 : index
    %c0_106 = arith.constant 0 : index
    %c0_107 = arith.constant 0 : index
    %160 = vector.load %arg6[%c0_104, %c3_105, %c0_106, %c0_107] : memref<1x10x8x32xf32, #tpu.memory_space<vmem>>, vector<1x1x8x32xf32>
    %161 = vector.shape_cast %160 : vector<1x1x8x32xf32> to vector<8x32xf32>
    %162 = vector.shape_cast %159 : vector<8x32xf32> to vector<1x1x8x32xf32>
    tpu.vector_store %arg6[%c0_104, %c3_105, %c0_106, %c0_107], %162 {strides = array<i32>} : memref<1x10x8x32xf32, #tpu.memory_space<vmem>>, vector<1x1x8x32xf32>,
    %c4_i32 = arith.constant 4 : i32
    %163 = vector.broadcast %c4_i32 : i32 to vector<16x32xi32>
    %164 = arith.cmpi eq, %56, %163 : vector<16x32xi32>
    %c0_108 = arith.constant 0 : index
    %c4 = arith.constant 4 : index
    %c0_109 = arith.constant 0 : index
    %c0_110 = arith.constant 0 : index
    %165 = vector.load %arg5[%c0_108, %c4, %c0_109, %c0_110] : memref<1x10x8x32xf32, #tpu.memory_space<vmem>>, vector<1x1x8x32xf32>
    %166 = vector.shape_cast %165 : vector<1x1x8x32xf32> to vector<8x32xf32>
    %167 = arith.extui %164 : vector<16x32xi1> to vector<16x32xi32>
    %168 = arith.sitofp %167 : vector<16x32xi32> to vector<16x32xf32>
    %169 = vector.shape_cast %168 : vector<16x32xf32> to vector<2x8x32xf32>
    %cst_111 = arith.constant dense<0.000000e+00> : vector<8x32xf32>
    %170 = vector.multi_reduction <add>, %169, %cst_111 [0] : vector<2x8x32xf32> to vector<8x32xf32>
    %171 = arith.addf %166, %170 : vector<8x32xf32>
    %c0_112 = arith.constant 0 : index
    %c4_113 = arith.constant 4 : index
    %c0_114 = arith.constant 0 : index
    %c0_115 = arith.constant 0 : index
    %172 = vector.load %arg5[%c0_112, %c4_113, %c0_114, %c0_115] : memref<1x10x8x32xf32, #tpu.memory_space<vmem>>, vector<1x1x8x32xf32>
    %173 = vector.shape_cast %172 : vector<1x1x8x32xf32> to vector<8x32xf32>
    %174 = vector.shape_cast %171 : vector<8x32xf32> to vector<1x1x8x32xf32>
    tpu.vector_store %arg5[%c0_112, %c4_113, %c0_114, %c0_115], %174 {strides = array<i32>} : memref<1x10x8x32xf32, #tpu.memory_space<vmem>>, vector<1x1x8x32xf32>,
    %c0_116 = arith.constant 0 : index
    %c4_117 = arith.constant 4 : index
    %c0_118 = arith.constant 0 : index
    %c0_119 = arith.constant 0 : index
    %175 = vector.load %arg6[%c0_116, %c4_117, %c0_118, %c0_119] : memref<1x10x8x32xf32, #tpu.memory_space<vmem>>, vector<1x1x8x32xf32>
    %176 = vector.shape_cast %175 : vector<1x1x8x32xf32> to vector<8x32xf32>
    %cst_120 = arith.constant 0.000000e+00 : f32
    %177 = vector.broadcast %cst_120 : f32 to vector<16x32xf32>
    %178 = arith.select %164, %48, %177 : vector<16x32xi1>, vector<16x32xf32>
    %179 = vector.shape_cast %178 : vector<16x32xf32> to vector<2x8x32xf32>
    %cst_121 = arith.constant dense<0.000000e+00> : vector<8x32xf32>
    %180 = vector.multi_reduction <add>, %179, %cst_121 [0] : vector<2x8x32xf32> to vector<8x32xf32>
    %181 = arith.addf %176, %180 : vector<8x32xf32>
    %c0_122 = arith.constant 0 : index
    %c4_123 = arith.constant 4 : index
    %c0_124 = arith.constant 0 : index
    %c0_125 = arith.constant 0 : index
    %182 = vector.load %arg6[%c0_122, %c4_123, %c0_124, %c0_125] : memref<1x10x8x32xf32, #tpu.memory_space<vmem>>, vector<1x1x8x32xf32>
    %183 = vector.shape_cast %182 : vector<1x1x8x32xf32> to vector<8x32xf32>
    %184 = vector.shape_cast %181 : vector<8x32xf32> to vector<1x1x8x32xf32>
    tpu.vector_store %arg6[%c0_122, %c4_123, %c0_124, %c0_125], %184 {strides = array<i32>} : memref<1x10x8x32xf32, #tpu.memory_space<vmem>>, vector<1x1x8x32xf32>,
    %c5_i32 = arith.constant 5 : i32
    %185 = vector.broadcast %c5_i32 : i32 to vector<16x32xi32>
    %186 = arith.cmpi eq, %56, %185 : vector<16x32xi32>
    %c0_126 = arith.constant 0 : index
    %c5 = arith.constant 5 : index
    %c0_127 = arith.constant 0 : index
    %c0_128 = arith.constant 0 : index
    %187 = vector.load %arg5[%c0_126, %c5, %c0_127, %c0_128] : memref<1x10x8x32xf32, #tpu.memory_space<vmem>>, vector<1x1x8x32xf32>
    %188 = vector.shape_cast %187 : vector<1x1x8x32xf32> to vector<8x32xf32>
    %189 = arith.extui %186 : vector<16x32xi1> to vector<16x32xi32>
    %190 = arith.sitofp %189 : vector<16x32xi32> to vector<16x32xf32>
    %191 = vector.shape_cast %190 : vector<16x32xf32> to vector<2x8x32xf32>
    %cst_129 = arith.constant dense<0.000000e+00> : vector<8x32xf32>
    %192 = vector.multi_reduction <add>, %191, %cst_129 [0] : vector<2x8x32xf32> to vector<8x32xf32>
    %193 = arith.addf %188, %192 : vector<8x32xf32>
    %c0_130 = arith.constant 0 : index
    %c5_131 = arith.constant 5 : index
    %c0_132 = arith.constant 0 : index
    %c0_133 = arith.constant 0 : index
    %194 = vector.load %arg5[%c0_130, %c5_131, %c0_132, %c0_133] : memref<1x10x8x32xf32, #tpu.memory_space<vmem>>, vector<1x1x8x32xf32>
    %195 = vector.shape_cast %194 : vector<1x1x8x32xf32> to vector<8x32xf32>
    %196 = vector.shape_cast %193 : vector<8x32xf32> to vector<1x1x8x32xf32>
    tpu.vector_store %arg5[%c0_130, %c5_131, %c0_132, %c0_133], %196 {strides = array<i32>} : memref<1x10x8x32xf32, #tpu.memory_space<vmem>>, vector<1x1x8x32xf32>,
    %c0_134 = arith.constant 0 : index
    %c5_135 = arith.constant 5 : index
    %c0_136 = arith.constant 0 : index
    %c0_137 = arith.constant 0 : index
    %197 = vector.load %arg6[%c0_134, %c5_135, %c0_136, %c0_137] : memref<1x10x8x32xf32, #tpu.memory_space<vmem>>, vector<1x1x8x32xf32>
    %198 = vector.shape_cast %197 : vector<1x1x8x32xf32> to vector<8x32xf32>
    %cst_138 = arith.constant 0.000000e+00 : f32
    %199 = vector.broadcast %cst_138 : f32 to vector<16x32xf32>
    %200 = arith.select %186, %48, %199 : vector<16x32xi1>, vector<16x32xf32>
    %201 = vector.shape_cast %200 : vector<16x32xf32> to vector<2x8x32xf32>
    %cst_139 = arith.constant dense<0.000000e+00> : vector<8x32xf32>
    %202 = vector.multi_reduction <add>, %201, %cst_139 [0] : vector<2x8x32xf32> to vector<8x32xf32>
    %203 = arith.addf %198, %202 : vector<8x32xf32>
    %c0_140 = arith.constant 0 : index
    %c5_141 = arith.constant 5 : index
    %c0_142 = arith.constant 0 : index
    %c0_143 = arith.constant 0 : index
    %204 = vector.load %arg6[%c0_140, %c5_141, %c0_142, %c0_143] : memref<1x10x8x32xf32, #tpu.memory_space<vmem>>, vector<1x1x8x32xf32>
    %205 = vector.shape_cast %204 : vector<1x1x8x32xf32> to vector<8x32xf32>
    %206 = vector.shape_cast %203 : vector<8x32xf32> to vector<1x1x8x32xf32>
    tpu.vector_store %arg6[%c0_140, %c5_141, %c0_142, %c0_143], %206 {strides = array<i32>} : memref<1x10x8x32xf32, #tpu.memory_space<vmem>>, vector<1x1x8x32xf32>,
    %c6_i32 = arith.constant 6 : i32
    %207 = vector.broadcast %c6_i32 : i32 to vector<16x32xi32>
    %208 = arith.cmpi eq, %56, %207 : vector<16x32xi32>
    %c0_144 = arith.constant 0 : index
    %c6 = arith.constant 6 : index
    %c0_145 = arith.constant 0 : index
    %c0_146 = arith.constant 0 : index
    %209 = vector.load %arg5[%c0_144, %c6, %c0_145, %c0_146] : memref<1x10x8x32xf32, #tpu.memory_space<vmem>>, vector<1x1x8x32xf32>
    %210 = vector.shape_cast %209 : vector<1x1x8x32xf32> to vector<8x32xf32>
    %211 = arith.extui %208 : vector<16x32xi1> to vector<16x32xi32>
    %212 = arith.sitofp %211 : vector<16x32xi32> to vector<16x32xf32>
    %213 = vector.shape_cast %212 : vector<16x32xf32> to vector<2x8x32xf32>
    %cst_147 = arith.constant dense<0.000000e+00> : vector<8x32xf32>
    %214 = vector.multi_reduction <add>, %213, %cst_147 [0] : vector<2x8x32xf32> to vector<8x32xf32>
    %215 = arith.addf %210, %214 : vector<8x32xf32>
    %c0_148 = arith.constant 0 : index
    %c6_149 = arith.constant 6 : index
    %c0_150 = arith.constant 0 : index
    %c0_151 = arith.constant 0 : index
    %216 = vector.load %arg5[%c0_148, %c6_149, %c0_150, %c0_151] : memref<1x10x8x32xf32, #tpu.memory_space<vmem>>, vector<1x1x8x32xf32>
    %217 = vector.shape_cast %216 : vector<1x1x8x32xf32> to vector<8x32xf32>
    %218 = vector.shape_cast %215 : vector<8x32xf32> to vector<1x1x8x32xf32>
    tpu.vector_store %arg5[%c0_148, %c6_149, %c0_150, %c0_151], %218 {strides = array<i32>} : memref<1x10x8x32xf32, #tpu.memory_space<vmem>>, vector<1x1x8x32xf32>,
    %c0_152 = arith.constant 0 : index
    %c6_153 = arith.constant 6 : index
    %c0_154 = arith.constant 0 : index
    %c0_155 = arith.constant 0 : index
    %219 = vector.load %arg6[%c0_152, %c6_153, %c0_154, %c0_155] : memref<1x10x8x32xf32, #tpu.memory_space<vmem>>, vector<1x1x8x32xf32>
    %220 = vector.shape_cast %219 : vector<1x1x8x32xf32> to vector<8x32xf32>
    %cst_156 = arith.constant 0.000000e+00 : f32
    %221 = vector.broadcast %cst_156 : f32 to vector<16x32xf32>
    %222 = arith.select %208, %48, %221 : vector<16x32xi1>, vector<16x32xf32>
    %223 = vector.shape_cast %222 : vector<16x32xf32> to vector<2x8x32xf32>
    %cst_157 = arith.constant dense<0.000000e+00> : vector<8x32xf32>
    %224 = vector.multi_reduction <add>, %223, %cst_157 [0] : vector<2x8x32xf32> to vector<8x32xf32>
    %225 = arith.addf %220, %224 : vector<8x32xf32>
    %c0_158 = arith.constant 0 : index
    %c6_159 = arith.constant 6 : index
    %c0_160 = arith.constant 0 : index
    %c0_161 = arith.constant 0 : index
    %226 = vector.load %arg6[%c0_158, %c6_159, %c0_160, %c0_161] : memref<1x10x8x32xf32, #tpu.memory_space<vmem>>, vector<1x1x8x32xf32>
    %227 = vector.shape_cast %226 : vector<1x1x8x32xf32> to vector<8x32xf32>
    %228 = vector.shape_cast %225 : vector<8x32xf32> to vector<1x1x8x32xf32>
    tpu.vector_store %arg6[%c0_158, %c6_159, %c0_160, %c0_161], %228 {strides = array<i32>} : memref<1x10x8x32xf32, #tpu.memory_space<vmem>>, vector<1x1x8x32xf32>,
    %c7_i32 = arith.constant 7 : i32
    %229 = vector.broadcast %c7_i32 : i32 to vector<16x32xi32>
    %230 = arith.cmpi eq, %56, %229 : vector<16x32xi32>
    %c0_162 = arith.constant 0 : index
    %c7 = arith.constant 7 : index
    %c0_163 = arith.constant 0 : index
    %c0_164 = arith.constant 0 : index
    %231 = vector.load %arg5[%c0_162, %c7, %c0_163, %c0_164] : memref<1x10x8x32xf32, #tpu.memory_space<vmem>>, vector<1x1x8x32xf32>
    %232 = vector.shape_cast %231 : vector<1x1x8x32xf32> to vector<8x32xf32>
    %233 = arith.extui %230 : vector<16x32xi1> to vector<16x32xi32>
    %234 = arith.sitofp %233 : vector<16x32xi32> to vector<16x32xf32>
    %235 = vector.shape_cast %234 : vector<16x32xf32> to vector<2x8x32xf32>
    %cst_165 = arith.constant dense<0.000000e+00> : vector<8x32xf32>
    %236 = vector.multi_reduction <add>, %235, %cst_165 [0] : vector<2x8x32xf32> to vector<8x32xf32>
    %237 = arith.addf %232, %236 : vector<8x32xf32>
    %c0_166 = arith.constant 0 : index
    %c7_167 = arith.constant 7 : index
    %c0_168 = arith.constant 0 : index
    %c0_169 = arith.constant 0 : index
    %238 = vector.load %arg5[%c0_166, %c7_167, %c0_168, %c0_169] : memref<1x10x8x32xf32, #tpu.memory_space<vmem>>, vector<1x1x8x32xf32>
    %239 = vector.shape_cast %238 : vector<1x1x8x32xf32> to vector<8x32xf32>
    %240 = vector.shape_cast %237 : vector<8x32xf32> to vector<1x1x8x32xf32>
    tpu.vector_store %arg5[%c0_166, %c7_167, %c0_168, %c0_169], %240 {strides = array<i32>} : memref<1x10x8x32xf32, #tpu.memory_space<vmem>>, vector<1x1x8x32xf32>,
    %c0_170 = arith.constant 0 : index
    %c7_171 = arith.constant 7 : index
    %c0_172 = arith.constant 0 : index
    %c0_173 = arith.constant 0 : index
    %241 = vector.load %arg6[%c0_170, %c7_171, %c0_172, %c0_173] : memref<1x10x8x32xf32, #tpu.memory_space<vmem>>, vector<1x1x8x32xf32>
    %242 = vector.shape_cast %241 : vector<1x1x8x32xf32> to vector<8x32xf32>
    %cst_174 = arith.constant 0.000000e+00 : f32
    %243 = vector.broadcast %cst_174 : f32 to vector<16x32xf32>
    %244 = arith.select %230, %48, %243 : vector<16x32xi1>, vector<16x32xf32>
    %245 = vector.shape_cast %244 : vector<16x32xf32> to vector<2x8x32xf32>
    %cst_175 = arith.constant dense<0.000000e+00> : vector<8x32xf32>
    %246 = vector.multi_reduction <add>, %245, %cst_175 [0] : vector<2x8x32xf32> to vector<8x32xf32>
    %247 = arith.addf %242, %246 : vector<8x32xf32>
    %c0_176 = arith.constant 0 : index
    %c7_177 = arith.constant 7 : index
    %c0_178 = arith.constant 0 : index
    %c0_179 = arith.constant 0 : index
    %248 = vector.load %arg6[%c0_176, %c7_177, %c0_178, %c0_179] : memref<1x10x8x32xf32, #tpu.memory_space<vmem>>, vector<1x1x8x32xf32>
    %249 = vector.shape_cast %248 : vector<1x1x8x32xf32> to vector<8x32xf32>
    %250 = vector.shape_cast %247 : vector<8x32xf32> to vector<1x1x8x32xf32>
    tpu.vector_store %arg6[%c0_176, %c7_177, %c0_178, %c0_179], %250 {strides = array<i32>} : memref<1x10x8x32xf32, #tpu.memory_space<vmem>>, vector<1x1x8x32xf32>,
    %c8_i32 = arith.constant 8 : i32
    %251 = vector.broadcast %c8_i32 : i32 to vector<16x32xi32>
    %252 = arith.cmpi eq, %56, %251 : vector<16x32xi32>
    %c0_180 = arith.constant 0 : index
    %c8 = arith.constant 8 : index
    %c0_181 = arith.constant 0 : index
    %c0_182 = arith.constant 0 : index
    %253 = vector.load %arg5[%c0_180, %c8, %c0_181, %c0_182] : memref<1x10x8x32xf32, #tpu.memory_space<vmem>>, vector<1x1x8x32xf32>
    %254 = vector.shape_cast %253 : vector<1x1x8x32xf32> to vector<8x32xf32>
    %255 = arith.extui %252 : vector<16x32xi1> to vector<16x32xi32>
    %256 = arith.sitofp %255 : vector<16x32xi32> to vector<16x32xf32>
    %257 = vector.shape_cast %256 : vector<16x32xf32> to vector<2x8x32xf32>
    %cst_183 = arith.constant dense<0.000000e+00> : vector<8x32xf32>
    %258 = vector.multi_reduction <add>, %257, %cst_183 [0] : vector<2x8x32xf32> to vector<8x32xf32>
    %259 = arith.addf %254, %258 : vector<8x32xf32>
    %c0_184 = arith.constant 0 : index
    %c8_185 = arith.constant 8 : index
    %c0_186 = arith.constant 0 : index
    %c0_187 = arith.constant 0 : index
    %260 = vector.load %arg5[%c0_184, %c8_185, %c0_186, %c0_187] : memref<1x10x8x32xf32, #tpu.memory_space<vmem>>, vector<1x1x8x32xf32>
    %261 = vector.shape_cast %260 : vector<1x1x8x32xf32> to vector<8x32xf32>
    %262 = vector.shape_cast %259 : vector<8x32xf32> to vector<1x1x8x32xf32>
    tpu.vector_store %arg5[%c0_184, %c8_185, %c0_186, %c0_187], %262 {strides = array<i32>} : memref<1x10x8x32xf32, #tpu.memory_space<vmem>>, vector<1x1x8x32xf32>,
    %c0_188 = arith.constant 0 : index
    %c8_189 = arith.constant 8 : index
    %c0_190 = arith.constant 0 : index
    %c0_191 = arith.constant 0 : index
    %263 = vector.load %arg6[%c0_188, %c8_189, %c0_190, %c0_191] : memref<1x10x8x32xf32, #tpu.memory_space<vmem>>, vector<1x1x8x32xf32>
    %264 = vector.shape_cast %263 : vector<1x1x8x32xf32> to vector<8x32xf32>
    %cst_192 = arith.constant 0.000000e+00 : f32
    %265 = vector.broadcast %cst_192 : f32 to vector<16x32xf32>
    %266 = arith.select %252, %48, %265 : vector<16x32xi1>, vector<16x32xf32>
    %267 = vector.shape_cast %266 : vector<16x32xf32> to vector<2x8x32xf32>
    %cst_193 = arith.constant dense<0.000000e+00> : vector<8x32xf32>
    %268 = vector.multi_reduction <add>, %267, %cst_193 [0] : vector<2x8x32xf32> to vector<8x32xf32>
    %269 = arith.addf %264, %268 : vector<8x32xf32>
    %c0_194 = arith.constant 0 : index
    %c8_195 = arith.constant 8 : index
    %c0_196 = arith.constant 0 : index
    %c0_197 = arith.constant 0 : index
    %270 = vector.load %arg6[%c0_194, %c8_195, %c0_196, %c0_197] : memref<1x10x8x32xf32, #tpu.memory_space<vmem>>, vector<1x1x8x32xf32>
    %271 = vector.shape_cast %270 : vector<1x1x8x32xf32> to vector<8x32xf32>
    %272 = vector.shape_cast %269 : vector<8x32xf32> to vector<1x1x8x32xf32>
    tpu.vector_store %arg6[%c0_194, %c8_195, %c0_196, %c0_197], %272 {strides = array<i32>} : memref<1x10x8x32xf32, #tpu.memory_space<vmem>>, vector<1x1x8x32xf32>,
    %c1_i32_198 = arith.constant 1 : i32
    return
  }
  func.func @transform_0(%arg0: i32, %arg1: i32) -> (i32, i32) {
    %c1_i32 = arith.constant 1 : i32
    %0 = arith.muli %arg0, %c1_i32 : i32
    %1 = arith.addi %0, %arg1 : i32
    %c0_i32 = arith.constant 0 : i32
    %2 = arith.minsi %1, %c0_i32 : i32
    %c0_i32_0 = arith.constant 0 : i32
    %c0_i32_1 = arith.constant 0 : i32
    return %2, %c0_i32_0 : i32, i32
  }
  func.func @transform_1(%arg0: i32, %arg1: i32) -> (i32, i32) {
    %c1_i32 = arith.constant 1 : i32
    %0 = arith.muli %arg0, %c1_i32 : i32
    %1 = arith.addi %0, %arg1 : i32
    %c0_i32 = arith.constant 0 : i32
    %2 = arith.minsi %1, %c0_i32 : i32
    %c0_i32_0 = arith.constant 0 : i32
    %c0_i32_1 = arith.constant 0 : i32
    return %2, %c0_i32_0 : i32, i32
  }
  func.func @transform_2(%arg0: i32, %arg1: i32) -> (i32, i32) {
    %c1_i32 = arith.constant 1 : i32
    %0 = arith.muli %arg0, %c1_i32 : i32
    %1 = arith.addi %0, %arg1 : i32
    %c0_i32 = arith.constant 0 : i32
    %2 = arith.minsi %1, %c0_i32 : i32
    %c0_i32_0 = arith.constant 0 : i32
    %c0_i32_1 = arith.constant 0 : i32
    return %2, %c0_i32_0 : i32, i32
  }
  func.func @transform_3(%arg0: i32, %arg1: i32) -> (i32, i32, i32, i32) {
    %c0_i32 = arith.constant 0 : i32
    %c0_i32_0 = arith.constant 0 : i32
    %c0_i32_1 = arith.constant 0 : i32
    %c0_i32_2 = arith.constant 0 : i32
    return %arg0, %c0_i32, %c0_i32_0, %c0_i32_1 : i32, i32, i32, i32
  }
  func.func @transform_4(%arg0: i32, %arg1: i32) -> (i32, i32, i32, i32) {
    %c0_i32 = arith.constant 0 : i32
    %c0_i32_0 = arith.constant 0 : i32
    %c0_i32_1 = arith.constant 0 : i32
    %c0_i32_2 = arith.constant 0 : i32
    return %arg0, %c0_i32, %c0_i32_0, %c0_i32_1 : i32, i32, i32, i32
  }
}

</mosaic_0001>

<llo_original>
// kernel: ghmc_loss.1
$region0: #{ghmc_loss.1}
  #allocation0 [shape = 'u32[]', space=smem, size = 0x4, offset = 0x4, fixed_abs, tag = 'smem constant byte address 0x4 - core index']
  #allocation1 [shape = 'u32[72,128]{1,0:T(1,128)}', space=vmem, size = 0x9000, scoped, tag = 'internal scratch']
  %s0 = inlined_call_operand.hbm [shape: f32[16,32], index: 0, kind: input, shape index: {}]
  %s1 = inlined_call_operand.hbm [shape: f32[16,32], index: 1, kind: input, shape index: {}]
  %s2 = inlined_call_operand.hbm [shape: f32[16,32], index: 2, kind: input, shape index: {}]
  %s3 = inlined_call_operand.vmem [shape: f32[1,10,8,32], index: 3, kind: output, shape index: {0}]
  %s4 = inlined_call_operand.vmem [shape: f32[1,10,8,32], index: 4, kind: output, shape index: {1}]
  %5 = xla_tuple %s3, %s4
  %s6 = sld [smem:[#allocation0]]
  $region46: #{ghmc_loss.1} parent=0
    _
  %s8 = ssub.s32 1, %s6
  %s9 = scalar_select 0, %s8, %s6
  $region1: #{ghmc_loss.1} parent=0
    #allocation2 [shape = 'u8[8192]{0}', space=vmem, size = 0x2000, scoped, tag = 'input window, operand 0, single buffered']
    #allocation3 [shape = 's32[1]{0}', space=sflag, size = 0x4, scoped, tag = 'scoped memory for ghmc_loss.1']
    #allocation4 [shape = 'u8[8192]{0}', space=vmem, size = 0x2000, scoped, tag = 'input window, operand 1, single buffered']
    #allocation5 [shape = 's32[1]{0}', space=sflag, size = 0x4, scoped, tag = 'scoped memory for ghmc_loss.1']
    #allocation6 [shape = 'u8[8192]{0}', space=vmem, size = 0x2000, scoped, tag = 'input window, operand 2, single buffered']
    %10 = vsyncpa [#allocation3], 0
    %11 = vsyncpa [#allocation5], 0
    // Predicated region
    $region2: #{ghmc_loss.1} parent=1 // pred_check
      _
    $region3: #{ghmc_loss.1} parent=1 // pred_check_branch
      %13 = sbr.rel (0) target = $region5
    $region4: #{ghmc_loss.1} parent=1 // pred_region
      %s14 = sadd.s32 0, 0
      %p15 = scmp.lt.s32.totalorder %s14, 0
      %s16 = scalar_select %p15, %s14, 0
      %s17 = smul.u32 2, %s16
      %19 = vsyncadd [#allocation3], 0
      %s20 = smul.addr %s17, 8
      %s21 = scalar_lea.hbm %s0, %s20
      %s22 = sshll.u32 %s21, 4
      %s23 = int_to_ptr.hbm [resolvable:$true] %s22
      %s24 = sshll.u32 [#allocation2], 4
      %s25 = int_to_ptr.vmem [resolvable:$true] %s24
      %30 = dma.hbm_to_vmem [thread:$0]  %s23, 256, %s25, [#allocation3], 128, 128, 8
    $region5: #{ghmc_loss.1} parent=1 // pred_fallthru
      _
    // Predicated region
    $region6: #{ghmc_loss.1} parent=1 // pred_check
      _
    $region7: #{ghmc_loss.1} parent=1 // pred_check_branch
      %32 = sbr.rel (0) target = $region9
    $region8: #{ghmc_loss.1} parent=1 // pred_region
      %s33 = sadd.s32 0, 0
      %p34 = scmp.lt.s32.totalorder %s33, 0
      %s35 = scalar_select %p34, %s33, 0
      %s36 = smul.u32 2, %s35
      %38 = vsyncadd [#allocation5], 0
      %s39 = smul.addr %s36, 8
      %s40 = scalar_lea.hbm %s1, %s39
      %s41 = sshll.u32 %s40, 4
      %s42 = int_to_ptr.hbm [resolvable:$true] %s41
      %s43 = sshll.u32 [#allocation4], 4
      %s44 = int_to_ptr.vmem [resolvable:$true] %s43
      %49 = dma.hbm_to_vmem [thread:$0]  %s42, 256, %s44, [#allocation5], 128, 128, 8
    $region9: #{ghmc_loss.1} parent=1 // pred_fallthru
      _
    // Predicated region
    $region10: #{ghmc_loss.1} parent=1 // pred_check
      _
    $region11: #{ghmc_loss.1} parent=1 // pred_check_branch
      %51 = sbr.rel (0) target = $region13
    $region12: #{ghmc_loss.1} parent=1 // pred_region
      %s52 = sadd.s32 0, 0
      %p53 = scmp.lt.s32.totalorder %s52, 0
      %s54 = scalar_select %p53, %s52, 0
      %s55 = smul.u32 2, %s54
      %57 = vsyncadd [#allocation5], 0
      %s58 = smul.addr %s55, 8
      %s59 = scalar_lea.hbm %s2, %s58
      %s60 = sshll.u32 %s59, 4
      %s61 = int_to_ptr.hbm [resolvable:$true] %s60
      %s62 = sshll.u32 [#allocation6], 4
      %s63 = int_to_ptr.vmem [resolvable:$true] %s62
      %68 = dma.hbm_to_vmem [thread:$0]  %s61, 256, %s63, [#allocation5], 128, 128, 8
    $region13: #{ghmc_loss.1} parent=1 // pred_fallthru
      _
    // Predicated region
    $region14: #{ghmc_loss.1} parent=1 // pred_check
      _
    $region15: #{ghmc_loss.1} parent=1 // pred_check_branch
      %70 = sbr.rel (0) target = $region17
    $region16: #{ghmc_loss.1} parent=1 // pred_region
      %72 = dma.done [#allocation3], 256
    $region17: #{ghmc_loss.1} parent=1 // pred_fallthru
      _
    // Predicated region
    $region18: #{ghmc_loss.1} parent=1 // pred_check
      _
    $region19: #{ghmc_loss.1} parent=1 // pred_check_branch
      %74 = sbr.rel (0) target = $region21
    $region20: #{ghmc_loss.1} parent=1 // pred_region
      %76 = dma.done [#allocation5], 256
    $region21: #{ghmc_loss.1} parent=1 // pred_fallthru
      _
    // Predicated region
    $region22: #{ghmc_loss.1} parent=1 // pred_check
      _
    $region23: #{ghmc_loss.1} parent=1 // pred_check_branch
      %78 = sbr.rel (0) target = $region25
    $region24: #{ghmc_loss.1} parent=1 // pred_region
      %80 = dma.done [#allocation5], 256
    $region25: #{ghmc_loss.1} parent=1 // pred_fallthru
      _
    %s81 = sadd.s32 0, 0
    %p82 = scmp.lt.s32.totalorder %s81, 0
    %s83 = scalar_select %p82, %s81, 0
    %s84 = smul.u32 2, %s83
    %s85 = sadd.s32 0, 0
    %p86 = scmp.lt.s32.totalorder %s85, 0
    %s87 = scalar_select %p86, %s85, 0
    %s88 = smul.u32 2, %s87
    %s89 = sadd.s32 0, 0
    %p90 = scmp.lt.s32.totalorder %s89, 0
    %s91 = scalar_select %p90, %s89, 0
    %s92 = smul.u32 2, %s91
    %p93 = scmp.eq.s32.totalorder 0, 0
    // Predicated region
    $region26: #{ghmc_loss.1} parent=1 // pred_check
      %p94 = pneg %p93
    $region27: #{ghmc_loss.1} parent=1 // pred_check_branch
      %96 = sbr.rel (%p94) target = $region29
    $region28: #{ghmc_loss.1} parent=1 // pred_region
      %vm97 = vcmask 261120
      %98 = vst.msk [vmem:[%s3] sm:$0xff] %vm97, 0.0
      %99 = vst.msk [vmem:[%s3 + $0x8] sm:$0xff] %vm97, 0.0
      %100 = vst.msk [vmem:[%s3 + $0x10] sm:$0xff] %vm97, 0.0
      %101 = vst.msk [vmem:[%s3 + $0x18] sm:$0xff] %vm97, 0.0
      %102 = vst.msk [vmem:[%s3 + $0x20] sm:$0xff] %vm97, 0.0
      %103 = vst.msk [vmem:[%s3 + $0x28] sm:$0xff] %vm97, 0.0
      %104 = vst.msk [vmem:[%s3 + $0x30] sm:$0xff] %vm97, 0.0
      %105 = vst.msk [vmem:[%s3 + $0x38] sm:$0xff] %vm97, 0.0
      %106 = vst.msk [vmem:[%s3 + $0x40] sm:$0xff] %vm97, 0.0
      %107 = vst.msk [vmem:[%s3 + $0x48] sm:$0xff] %vm97, 0.0
      %108 = vst.msk [vmem:[%s4] sm:$0xff] %vm97, 0.0
      %109 = vst.msk [vmem:[%s4 + $0x8] sm:$0xff] %vm97, 0.0
      %110 = vst.msk [vmem:[%s4 + $0x10] sm:$0xff] %vm97, 0.0
      %111 = vst.msk [vmem:[%s4 + $0x18] sm:$0xff] %vm97, 0.0
      %112 = vst.msk [vmem:[%s4 + $0x20] sm:$0xff] %vm97, 0.0
      %113 = vst.msk [vmem:[%s4 + $0x28] sm:$0xff] %vm97, 0.0
      %114 = vst.msk [vmem:[%s4 + $0x30] sm:$0xff] %vm97, 0.0
      %115 = vst.msk [vmem:[%s4 + $0x38] sm:$0xff] %vm97, 0.0
      %116 = vst.msk [vmem:[%s4 + $0x40] sm:$0xff] %vm97, 0.0
      %117 = vst.msk [vmem:[%s4 + $0x48] sm:$0xff] %vm97, 0.0
    $region29: #{ghmc_loss.1} parent=1 // pred_fallthru
      _
    %s118 = sadd.s32 0, 0
    %s119 = smul.u32 %s118, 16
    %v120 = vld [vmem:[#allocation2] sm:$0xff]
    %v121 = vld [vmem:[#allocation2 + $0x8] sm:$0xff]
    %v122 = vld [vmem:[#allocation4] sm:$0xff]
    %v123 = vld [vmem:[#allocation4 + $0x8] sm:$0xff]
    %v124 = vld [vmem:[#allocation6] sm:$0xff]
    %v125 = vld [vmem:[#allocation6 + $0x8] sm:$0xff]
    %v126 = vlaneseq
    %v127 = vshrl.u32 %v126, 7
    %v128 = vadd.s32 %v127, 8
    %s129 = sadd.s32 %s119, 0
    %v130 = vstv %s129
    %v131 = vadd.s32 %v130, %v127
    %v132 = vadd.s32 %v130, %v128
    %vm133 = vcmp.lt.s32.totalorder %v131, 16
    %vm134 = vcmp.lt.s32.totalorder %v132, 16
    %vm135 = vcmp.gt.f32.partialorder %v124, 0.0
    %vm136 = vcmp.gt.f32.partialorder %v125, 0.0
    %vm137 = vmand %vm135, %vm133
    %vm138 = vmand %vm136, %vm134
    %v139 = vand.u32 2147483647, %v120
    %v140 = vand.u32 2147483647, %v121
    %v141 = vsub.f32 0.0, %v139
    %v142 = vsub.f32 0.0, %v140
    %v143 = vmul.f32 %v141, 1.442695
    %v144 = vpow.pop %v143
    %v145 = vmul.f32 %v142, 1.442695
    %v146 = vpow.pop %v145
    %v147 = vadd.f32 %v144, 1.0
    %v148 = vadd.f32 %v146, 1.0
    %v149 = vrcp.pop %v147
    %v150 = vmul.f32 %v147, %v149
    %v151 = vsub.f32 1.0, %v150
    %v152 = vmul.f32 %v149, %v151
    %v153 = vadd.f32 %v149, %v152
    %vm154 = vweird.f32 %v147
    %vm155 = vweird.f32 %v149
    %vm156 = vmor %vm154, %vm155
    %v157 = vsel %vm156, %v149, %v153
    %v158 = vand.u32 2147483647, %v147
    %vm159 = vcmp.eq.f32.partialorder %v158, 8.507059e+37
    %v160 = vand.u32 %v147, 2147483648
    %v161 = vor.u32 1.1754944e-38, %v160
    %v162 = vsel %vm159, %v161, %v157
    %v163 = vmul.f32 1.0, %v162
    %v164 = vrcp.pop %v148
    %v165 = vmul.f32 %v148, %v164
    %v166 = vsub.f32 1.0, %v165
    %v167 = vmul.f32 %v164, %v166
    %v168 = vadd.f32 %v164, %v167
    %vm169 = vweird.f32 %v148
    %vm170 = vweird.f32 %v164
    %vm171 = vmor %vm169, %vm170
    %v172 = vsel %vm171, %v164, %v168
    %v173 = vand.u32 2147483647, %v148
    %vm174 = vcmp.eq.f32.partialorder %v173, 8.507059e+37
    %v175 = vand.u32 %v148, 2147483648
    %v176 = vor.u32 1.1754944e-38, %v175
    %v177 = vsel %vm174, %v176, %v172
    %v178 = vmul.f32 1.0, %v177
    %vm179 = vcmp.ge.f32.partialorder %v120, 0.0
    %vm180 = vcmp.ge.f32.partialorder %v121, 0.0
    %v181 = vmul.f32 %v144, %v163
    %v182 = vmul.f32 %v146, %v178
    %v183 = vsel %vm179, %v163, %v181
    %v184 = vsel %vm180, %v178, %v182
    %v185 = vsub.f32 %v183, %v122
    %v186 = vsub.f32 %v184, %v123
    %v187 = vand.u32 2147483647, %v185
    %v188 = vand.u32 2147483647, %v186
    %v189 = vmax.f32 %v120, 0.0
    %v190 = vmax.f32 %v121, 0.0
    %v191 = vmul.f32 %v120, %v122
    %v192 = vmul.f32 %v121, %v123
    %v193 = vsub.f32 %v189, %v191
    %v194 = vsub.f32 %v190, %v192
    %v195 = vlog2.pop %v147
    %v196 = vmul.f32 %v195, 0.6931472
    %v197 = vlog2.pop %v148
    %v198 = vmul.f32 %v197, 0.6931472
    %v199 = vadd.f32 %v193, %v196
    %v200 = vadd.f32 %v194, %v198
    %v201 = vsel %vm137, %v199, 0.0
    %v202 = vsel %vm138, %v200, 0.0
    %v203 = vmul.f32 %v187, 10.0
    %v204 = vmul.f32 %v188, 10.0
    %v205 = vfloor.f32 %v203
    %v206 = vfloor.f32 %v204
    %v207 = vcvt.f32.s32.to.zero.pseudo %v205
    %v208 = vcvt.f32.s32.to.zero.pseudo %v206
    %vm209 = vcmp.lt.s32.totalorder %v207, 9
    %v210 = vsel %vm209, %v207, 9
    %vm211 = vcmp.lt.s32.totalorder %v208, 9
    %v212 = vsel %vm211, %v208, 9
    %v213 = vsel %vm137, %v210, 4294967295
    %v214 = vsel %vm138, %v212, 4294967295
    %s215 = scalar_lea.vmem %s3, 72
    %v216 = vld [vmem:[%s215] sm:$0xff]
    %v217 = vsel %vm137, 1, 0
    %v218 = vsel %vm138, 1, 0
    %v219 = vcvt.s32.f32 %v217
    %v220 = vcvt.s32.f32 %v218
    %vm221 = vcmask 261120
    %v222 = vsel %vm221, %v219, 0.0
    %v223 = vsel %vm221, %v220, 0.0
    %v224 = vadd.f32 %v222, %v223
    %v225 = vadd.f32 %v216, %v224
    %226 = vst.msk [vmem:[%s215] sm:$0xff] %vm221, %v225
    %s227 = scalar_lea.vmem %s4, 72
    %v228 = vld [vmem:[%s227] sm:$0xff]
    %v229 = vsel %vm221, %v201, 0.0
    %v230 = vsel %vm221, %v202, 0.0
    %v231 = vadd.f32 %v229, %v230
    %v232 = vadd.f32 %v228, %v231
    %233 = vst.msk [vmem:[%s227] sm:$0xff] %vm221, %v232
    %vm234 = vcmp.eq.s32.totalorder %v213, 0
    %vm235 = vcmp.eq.s32.totalorder %v214, 0
    %v236 = vld [vmem:[%s3] sm:$0xff]
    %v237 = vsel %vm234, 1, 0
    %v238 = vsel %vm235, 1, 0
    %v239 = vcvt.s32.f32 %v237
    %v240 = vcvt.s32.f32 %v238
    %v241 = vsel %vm221, %v239, 0.0
    %v242 = vsel %vm221, %v240, 0.0
    %v243 = vadd.f32 %v241, %v242
    %v244 = vadd.f32 %v236, %v243
    %245 = vst.msk [vmem:[%s3] sm:$0xff] %vm221, %v244
    %v246 = vld [vmem:[%s4] sm:$0xff]
    %v247 = vsel %vm234, %v201, 0.0
    %v248 = vsel %vm235, %v202, 0.0
    %v249 = vsel %vm221, %v247, 0.0
    %v250 = vsel %vm221, %v248, 0.0
    %v251 = vadd.f32 %v249, %v250
    %v252 = vadd.f32 %v246, %v251
    %253 = vst.msk [vmem:[%s4] sm:$0xff] %vm221, %v252
    %vm254 = vcmp.eq.s32.totalorder %v213, 1
    %vm255 = vcmp.eq.s32.totalorder %v214, 1
    %s256 = scalar_lea.vmem %s3, 8
    %v257 = vld [vmem:[%s256] sm:$0xff]
    %v258 = vsel %vm254, 1, 0
    %v259 = vsel %vm255, 1, 0
    %v260 = vcvt.s32.f32 %v258
    %v261 = vcvt.s32.f32 %v259
    %v262 = vsel %vm221, %v260, 0.0
    %v263 = vsel %vm221, %v261, 0.0
    %v264 = vadd.f32 %v262, %v263
    %v265 = vadd.f32 %v257, %v264
    %266 = vst.msk [vmem:[%s256] sm:$0xff] %vm221, %v265
    %s267 = scalar_lea.vmem %s4, 8
    %v268 = vld [vmem:[%s267] sm:$0xff]
    %v269 = vsel %vm254, %v201, 0.0
    %v270 = vsel %vm255, %v202, 0.0
    %v271 = vsel %vm221, %v269, 0.0
    %v272 = vsel %vm221, %v270, 0.0
    %v273 = vadd.f32 %v271, %v272
    %v274 = vadd.f32 %v268, %v273
    %275 = vst.msk [vmem:[%s267] sm:$0xff] %vm221, %v274
    %vm276 = vcmp.eq.s32.totalorder %v213, 2
    %vm277 = vcmp.eq.s32.totalorder %v214, 2
    %s278 = scalar_lea.vmem %s3, 16
    %v279 = vld [vmem:[%s278] sm:$0xff]
    %v280 = vsel %vm276, 1, 0
    %v281 = vsel %vm277, 1, 0
    %v282 = vcvt.s32.f32 %v280
    %v283 = vcvt.s32.f32 %v281
    %v284 = vsel %vm221, %v282, 0.0
    %v285 = vsel %vm221, %v283, 0.0
    %v286 = vadd.f32 %v284, %v285
    %v287 = vadd.f32 %v279, %v286
    %288 = vst.msk [vmem:[%s278] sm:$0xff] %vm221, %v287
    %s289 = scalar_lea.vmem %s4, 16
    %v290 = vld [vmem:[%s289] sm:$0xff]
    %v291 = vsel %vm276, %v201, 0.0
    %v292 = vsel %vm277, %v202, 0.0
    %v293 = vsel %vm221, %v291, 0.0
    %v294 = vsel %vm221, %v292, 0.0
    %v295 = vadd.f32 %v293, %v294
    %v296 = vadd.f32 %v290, %v295
    %297 = vst.msk [vmem:[%s289] sm:$0xff] %vm221, %v296
    %vm298 = vcmp.eq.s32.totalorder %v213, 3
    %vm299 = vcmp.eq.s32.totalorder %v214, 3
    %s300 = scalar_lea.vmem %s3, 24
    %v301 = vld [vmem:[%s300] sm:$0xff]
    %v302 = vsel %vm298, 1, 0
    %v303 = vsel %vm299, 1, 0
    %v304 = vcvt.s32.f32 %v302
    %v305 = vcvt.s32.f32 %v303
    %v306 = vsel %vm221, %v304, 0.0
    %v307 = vsel %vm221, %v305, 0.0
    %v308 = vadd.f32 %v306, %v307
    %v309 = vadd.f32 %v301, %v308
    %310 = vst.msk [vmem:[%s300] sm:$0xff] %vm221, %v309
    %s311 = scalar_lea.vmem %s4, 24
    %v312 = vld [vmem:[%s311] sm:$0xff]
    %v313 = vsel %vm298, %v201, 0.0
    %v314 = vsel %vm299, %v202, 0.0
    %v315 = vsel %vm221, %v313, 0.0
    %v316 = vsel %vm221, %v314, 0.0
    %v317 = vadd.f32 %v315, %v316
    %v318 = vadd.f32 %v312, %v317
    %319 = vst.msk [vmem:[%s311] sm:$0xff] %vm221, %v318
    %vm320 = vcmp.eq.s32.totalorder %v213, 4
    %vm321 = vcmp.eq.s32.totalorder %v214, 4
    %s322 = scalar_lea.vmem %s3, 32
    %v323 = vld [vmem:[%s322] sm:$0xff]
    %v324 = vsel %vm320, 1, 0
    %v325 = vsel %vm321, 1, 0
    %v326 = vcvt.s32.f32 %v324
    %v327 = vcvt.s32.f32 %v325
    %v328 = vsel %vm221, %v326, 0.0
    %v329 = vsel %vm221, %v327, 0.0
    %v330 = vadd.f32 %v328, %v329
    %v331 = vadd.f32 %v323, %v330
    %332 = vst.msk [vmem:[%s322] sm:$0xff] %vm221, %v331
    %s333 = scalar_lea.vmem %s4, 32
    %v334 = vld [vmem:[%s333] sm:$0xff]
    %v335 = vsel %vm320, %v201, 0.0
    %v336 = vsel %vm321, %v202, 0.0
    %v337 = vsel %vm221, %v335, 0.0
    %v338 = vsel %vm221, %v336, 0.0
    %v339 = vadd.f32 %v337, %v338
    %v340 = vadd.f32 %v334, %v339
    %341 = vst.msk [vmem:[%s333] sm:$0xff] %vm221, %v340
    %vm342 = vcmp.eq.s32.totalorder %v213, 5
    %vm343 = vcmp.eq.s32.totalorder %v214, 5
    %s344 = scalar_lea.vmem %s3, 40
    %v345 = vld [vmem:[%s344] sm:$0xff]
    %v346 = vsel %vm342, 1, 0
    %v347 = vsel %vm343, 1, 0
    %v348 = vcvt.s32.f32 %v346
    %v349 = vcvt.s32.f32 %v347
    %v350 = vsel %vm221, %v348, 0.0
    %v351 = vsel %vm221, %v349, 0.0
    %v352 = vadd.f32 %v350, %v351
    %v353 = vadd.f32 %v345, %v352
    %354 = vst.msk [vmem:[%s344] sm:$0xff] %vm221, %v353
    %s355 = scalar_lea.vmem %s4, 40
    %v356 = vld [vmem:[%s355] sm:$0xff]
    %v357 = vsel %vm342, %v201, 0.0
    %v358 = vsel %vm343, %v202, 0.0
    %v359 = vsel %vm221, %v357, 0.0
    %v360 = vsel %vm221, %v358, 0.0
    %v361 = vadd.f32 %v359, %v360
    %v362 = vadd.f32 %v356, %v361
    %363 = vst.msk [vmem:[%s355] sm:$0xff] %vm221, %v362
    %vm364 = vcmp.eq.s32.totalorder %v213, 6
    %vm365 = vcmp.eq.s32.totalorder %v214, 6
    %s366 = scalar_lea.vmem %s3, 48
    %v367 = vld [vmem:[%s366] sm:$0xff]
    %v368 = vsel %vm364, 1, 0
    %v369 = vsel %vm365, 1, 0
    %v370 = vcvt.s32.f32 %v368
    %v371 = vcvt.s32.f32 %v369
    %v372 = vsel %vm221, %v370, 0.0
    %v373 = vsel %vm221, %v371, 0.0
    %v374 = vadd.f32 %v372, %v373
    %v375 = vadd.f32 %v367, %v374
    %376 = vst.msk [vmem:[%s366] sm:$0xff] %vm221, %v375
    %s377 = scalar_lea.vmem %s4, 48
    %v378 = vld [vmem:[%s377] sm:$0xff]
    %v379 = vsel %vm364, %v201, 0.0
    %v380 = vsel %vm365, %v202, 0.0
    %v381 = vsel %vm221, %v379, 0.0
    %v382 = vsel %vm221, %v380, 0.0
    %v383 = vadd.f32 %v381, %v382
    %v384 = vadd.f32 %v378, %v383
    %385 = vst.msk [vmem:[%s377] sm:$0xff] %vm221, %v384
    %vm386 = vcmp.eq.s32.totalorder %v213, 7
    %vm387 = vcmp.eq.s32.totalorder %v214, 7
    %s388 = scalar_lea.vmem %s3, 56
    %v389 = vld [vmem:[%s388] sm:$0xff]
    %v390 = vsel %vm386, 1, 0
    %v391 = vsel %vm387, 1, 0
    %v392 = vcvt.s32.f32 %v390
    %v393 = vcvt.s32.f32 %v391
    %v394 = vsel %vm221, %v392, 0.0
    %v395 = vsel %vm221, %v393, 0.0
    %v396 = vadd.f32 %v394, %v395
    %v397 = vadd.f32 %v389, %v396
    %398 = vst.msk [vmem:[%s388] sm:$0xff] %vm221, %v397
    %s399 = scalar_lea.vmem %s4, 56
    %v400 = vld [vmem:[%s399] sm:$0xff]
    %v401 = vsel %vm386, %v201, 0.0
    %v402 = vsel %vm387, %v202, 0.0
    %v403 = vsel %vm221, %v401, 0.0
    %v404 = vsel %vm221, %v402, 0.0
    %v405 = vadd.f32 %v403, %v404
    %v406 = vadd.f32 %v400, %v405
    %407 = vst.msk [vmem:[%s399] sm:$0xff] %vm221, %v406
    %vm408 = vcmp.eq.s32.totalorder %v213, 8
    %vm409 = vcmp.eq.s32.totalorder %v214, 8
    %s410 = scalar_lea.vmem %s3, 64
    %v411 = vld [vmem:[%s410] sm:$0xff]
    %v412 = vsel %vm408, 1, 0
    %v413 = vsel %vm409, 1, 0
    %v414 = vcvt.s32.f32 %v412
    %v415 = vcvt.s32.f32 %v413
    %v416 = vsel %vm221, %v414, 0.0
    %v417 = vsel %vm221, %v415, 0.0
    %v418 = vadd.f32 %v416, %v417
    %v419 = vadd.f32 %v411, %v418
    %420 = vst.msk [vmem:[%s410] sm:$0xff] %vm221, %v419
    %s421 = scalar_lea.vmem %s4, 64
    %v422 = vld [vmem:[%s421] sm:$0xff]
    %v423 = vsel %vm408, %v201, 0.0
    %v424 = vsel %vm409, %v202, 0.0
    %v425 = vsel %vm221, %v423, 0.0
    %v426 = vsel %vm221, %v424, 0.0
    %v427 = vadd.f32 %v425, %v426
    %v428 = vadd.f32 %v422, %v427
    %429 = vst.msk [vmem:[%s421] sm:$0xff] %vm221, %v428
    // Predicated region
    $region30: #{ghmc_loss.1} parent=1 // pred_check
      _
    $region31: #{ghmc_loss.1} parent=1 // pred_check_branch
      %431 = sbr.rel (0) target = $region33
    $region32: #{ghmc_loss.1} parent=1 // pred_region
      _
    $region33: #{ghmc_loss.1} parent=1 // pred_fallthru
      _
    // Predicated region
    $region34: #{ghmc_loss.1} parent=1 // pred_check
      _
    $region35: #{ghmc_loss.1} parent=1 // pred_check_branch
      %433 = sbr.rel (0) target = $region37
    $region36: #{ghmc_loss.1} parent=1 // pred_region
      _
    $region37: #{ghmc_loss.1} parent=1 // pred_fallthru
      _
    // Predicated region
    $region38: #{ghmc_loss.1} parent=1 // pred_check
      _
    $region39: #{ghmc_loss.1} parent=1 // pred_check_branch
      %435 = sbr.rel (0) target = $region41
    $region40: #{ghmc_loss.1} parent=1 // pred_region
      _
    $region41: #{ghmc_loss.1} parent=1 // pred_fallthru
      _
    // Predicated region
    $region42: #{ghmc_loss.1} parent=1 // pred_check
      _
    $region43: #{ghmc_loss.1} parent=1 // pred_check_branch
      %437 = sbr.rel (0) target = $region45
    $region44: #{ghmc_loss.1} parent=1 // pred_region
      _
    $region45: #{ghmc_loss.1} parent=1 // pred_fallthru
      _
    %438 = vsyncpa [#allocation3], 1
    %439 = vsyncpa [#allocation5], 1

</llo_original>
